<compile_context>
chip_gen: v7x
topology: tpu7x:2x2x1
jax: 0.10.0
libtpu: 0.0.40
codegen_flags: <defaults>
</compile_context>

<pallas_src>
import functools

import jax
import jax.numpy as jnp
from jax.experimental import pallas as pl
from jax.experimental.pallas import tpu as pltpu


def _round_up(x, m):
    return ((x + m - 1) // m) * m


def _vmem_limit_bytes():
    """Per-generation VMEM limit: physical capacity minus headroom for compiler scratch."""
    phys = 64 * 1024 * 1024                       # v7x per-TensorCore (worst case)
    try:
        info = pltpu.get_tpu_info()
        phys = int(getattr(info, "vmem_capacity_bytes", phys))
    except Exception:
        pass
    return max(32 * 1024 * 1024, phys - 16 * 1024 * 1024)


def _choose_bt(B, Sp, Dp, itemsize, vmem_limit):
    """Batch tile sized to fill most of the VMEM budget (not a fixed MXU-row target)."""
    # constants: W^T, Wp^T (double-buffered by the pipeline) + bias
    weights = 2 * (2 * Dp * Dp * itemsize) + 2 * Dp * 4
    # per batch element: x + out blocks (double-buffered, input dtype) and f32 temps
    # (Wx / context / projection / residual: ~4x (Sp,Dp); scores + exp: 2x (Sp,Sp)).
    per_b = (4 * Sp * Dp * itemsize
             + 4 * Sp * Dp * 4
             + 2 * Sp * Sp * 4)
    budget = max(vmem_limit - weights - (8 << 20), per_b)
    bt = max(1, min(B, budget // per_b))
    if B >= 2:
        bt = min(bt, (B + 1) // 2)   # >= 2 grid steps: keeps both v7x TCs busy
    return int(bt)


def _mult_self_attn_kernel(x_ref, wt_ref, wpt_ref, bp_ref, o_ref, *, s_valid):
    # x_ref:   (Bt, Sp, Dp)  batch tile of inputs (zero-padded, lane-dense)
    # wt_ref:  (Dp, Dp)      attention weight, pre-transposed (y = x @ wt == x @ W.T)
    # wpt_ref: (Dp, Dp)      projection weight, pre-transposed
    # bp_ref:  (1, Dp)       projection bias (f32)
    # o_ref:   (Bt, Sp, Dp)
    bt, sp, dp = x_ref.shape
    x3 = x_ref[...]                                    # input dtype (f32 or bf16)
    x2 = x3.reshape(bt * sp, dp)                       # tile-aligned reshape (free)

    # Wx = x @ W.T -- token-parallel matmul on the flattened slab, f32 accumulation.
    wx2 = jnp.dot(x2, wt_ref[...], preferred_element_type=jnp.float32)
    wx3 = wx2.reshape(bt, sp, dp).astype(x3.dtype)

    # scores s[b] = Wx[b] @ x[b]^T  (contract feature dim; no transpose materialized)
    s = jnp.einsum("bqd,bkd->bqk", wx3, x3, preferred_element_type=jnp.float32)

    # additive mask bias: diagonal (and statically padded keys) -> -1e30
    q_idx = jax.lax.broadcasted_iota(jnp.int32, (sp, sp), 0)
    k_idx = jax.lax.broadcasted_iota(jnp.int32, (sp, sp), 1)
    masked = q_idx == k_idx
    if s_valid < sp:
        masked = masked | (k_idx >= s_valid)
    bias = jnp.where(masked, jnp.float32(-1e30), jnp.float32(0.0))
    s = s + bias[None]

    # softmax over keys in f32; normalize AFTER the context matmul so the multiply is
    # O(Bt*Sp*Dp) and the (Bt,Sp,Sp) probability temporary never exists.
    m = jnp.max(s, axis=-1, keepdims=True)
    e = jnp.exp(s - m)
    denom = jnp.sum(e, axis=-1, keepdims=True)

    c3 = jnp.einsum("bqk,bkd->bqd", e.astype(x3.dtype), x3,
                    preferred_element_type=jnp.float32)
    c3 = c3 * (1.0 / denom)                            # exact, (Bt,Sp,1) broadcast

    # projection + bias + ReLU (token-parallel matmul on flattened slab)
    c2 = c3.reshape(bt * sp, dp).astype(x3.dtype)
    p2 = jnp.dot(c2, wpt_ref[...], preferred_element_type=jnp.float32)
    p2 = jnp.maximum(p2 + bp_ref[...].astype(jnp.float32), 0.0)

    # residual (dropout is identity in eval mode)
    out2 = x2.astype(jnp.float32) + p2
    o_ref[...] = out2.reshape(bt, sp, dp).astype(o_ref.dtype)


def multiplicative_self_attention(x, w, wp, bp):
    """x: (B, S, D); w, wp: (D, D) nn.Linear-style weights (y = x @ W.T); bp: (D,)."""
    B, S, D = x.shape
    dtype = x.dtype
    itemsize = jnp.dtype(dtype).itemsize

    # Lane-dense padding: D -> multiple of 128 (lanes), S -> multiple of 8 (sublanes).
    Dp = _round_up(max(D, 128), 128)
    Sp = _round_up(max(S, 8), 8)

    vmem_limit = _vmem_limit_bytes()
    Bt = _choose_bt(B, Sp, Dp, itemsize, vmem_limit)
    Bp = _round_up(B, Bt)

    # Skip the wrapper pad (a full extra HBM pass) when already aligned.
    if (Bp, Sp, Dp) != (B, S, D):
        xp = jnp.pad(x, ((0, Bp - B), (0, Sp - S), (0, Dp - D)))
    else:
        xp = x

    pad_d = Dp - D
    wq = w.astype(dtype)
    wpq = wp.astype(dtype)
    bpq = bp.astype(jnp.float32)
    if pad_d:
        wq = jnp.pad(wq, ((0, pad_d), (0, pad_d)))
        wpq = jnp.pad(wpq, ((0, pad_d), (0, pad_d)))
        bpq = jnp.pad(bpq, (0, pad_d))
    # Pre-transpose the static weights once, outside the kernel: y = x @ wt == x @ W.T
    wt = wq.T
    wpt = wpq.T
    bp2 = bpq.reshape(1, Dp)

    kernel = functools.partial(_mult_self_attn_kernel, s_valid=S)

    out = pl.pallas_call(
        kernel,
        out_shape=jax.ShapeDtypeStruct((Bp, Sp, Dp), dtype),
        grid_spec=pltpu.PrefetchScalarGridSpec(
            num_scalar_prefetch=0,
            grid=(Bp // Bt,),
            in_specs=[
                pl.BlockSpec((Bt, Sp, Dp), lambda i: (i, 0, 0)),   # x (batch tile)
                pl.BlockSpec((Dp, Dp), lambda i: (0, 0)),          # W^T  (constant)
                pl.BlockSpec((Dp, Dp), lambda i: (0, 0)),          # Wp^T (constant)
                pl.BlockSpec((1, Dp), lambda i: (0, 0)),           # bias (constant)
            ],
            out_specs=pl.BlockSpec((Bt, Sp, Dp), lambda i: (i, 0, 0)),
        ),
        compiler_params=pltpu.CompilerParams(
            dimension_semantics=("parallel",),
            vmem_limit_bytes=int(vmem_limit),
        ),
    )(xp, wt, wpt, bp2)

    if (Bp, Sp, Dp) != (B, S, D):
        out = out[:B, :S, :D]
    return out


def _reference(x, w, wp, bp):
    hp = jax.lax.Precision.HIGHEST
    wx = jnp.einsum("bsd,ed->bse", x, w, precision=hp)
    s = jnp.einsum("bse,bte->bst", wx, x, precision=hp)
    S = x.shape[1]
    eye = jnp.eye(S, dtype=bool)
    s = jnp.where(eye[None], -jnp.inf, s)
    a = jax.nn.softmax(s, axis=-1)
    c = jnp.einsum("bst,btd->bsd", a, x, precision=hp)
    c = jax.nn.relu(jnp.einsum("bsd,ed->bse", c, wp, precision=hp) + bp[None, None, :])
    return x + c


if __name__ == "__main__":
    B, S, D = 2, 8, 32
    key = jax.random.PRNGKey(0)
    kx, kw, kwp, kbp = jax.random.split(key, 4)

    x = 0.5 * jax.random.normal(kx, (B, S, D), dtype=jnp.float32)
    # deterministic parameter init (uniform like nn.Linear default)
    bound = 1.0 / (D ** 0.5)
    w = jax.random.uniform(kw, (D, D), minval=-bound, maxval=bound, dtype=jnp.float32)
    wp = jax.random.uniform(kwp, (D, D), minval=-bound, maxval=bound, dtype=jnp.float32)
    bp = jax.random.uniform(kbp, (D,), minval=-bound, maxval=bound, dtype=jnp.float32)

    out = multiplicative_self_attention(x, w, wp, bp)
    out = jax.block_until_ready(out)

    ref = _reference(x, w, wp, bp)
    err = float(jnp.max(jnp.abs(out - ref)))
    # tolerance absorbs TPU matmul / exp implementation differences; real bugs are O(0.1+)
    assert err < 3e-2, f"mismatch vs reference: max abs err {err}"

    print("KERNEL_OK")
</pallas_src>

<mosaic_0001>
module attributes {stable_mosaic.version = 11 : i64} {
  func.func @_mult_self_attn_kernel(%arg0: i32, %arg1: memref<1x8x128xf32, #tpu.memory_space<vmem>>, %arg2: memref<128x128xf32, #tpu.memory_space<vmem>>, %arg3: memref<128x128xf32, #tpu.memory_space<vmem>>, %arg4: memref<1x128xf32, #tpu.memory_space<vmem>>, %arg5: memref<1x8x128xf32, #tpu.memory_space<vmem>>) attributes {dimension_semantics = [#tpu.dimension_semantics<parallel>], iteration_bounds = array<i64: 2>, scalar_prefetch = 0 : i64, scratch_operands = 0 : i64, tpu.core_type = #tpu.core_type<tc>, window_params = [{transform_indices = @transform_0, window_bounds = array<i64: 1, 8, 128>}, {pipeline_mode = #tpu.pipeline_mode<synchronous>, transform_indices = @transform_1, window_bounds = array<i64: 128, 128>}, {pipeline_mode = #tpu.pipeline_mode<synchronous>, transform_indices = @transform_2, window_bounds = array<i64: 128, 128>}, {pipeline_mode = #tpu.pipeline_mode<synchronous>, transform_indices = @transform_3, window_bounds = array<i64: 1, 128>}, {transform_indices = @transform_4, window_bounds = array<i64: 1, 8, 128>}]} {
    %c0 = arith.constant 0 : index
    %c0_0 = arith.constant 0 : index
    %c0_1 = arith.constant 0 : index
    %0 = vector.load %arg1[%c0, %c0_0, %c0_1] : memref<1x8x128xf32, #tpu.memory_space<vmem>>, vector<1x8x128xf32>
    %1 = vector.shape_cast %0 : vector<1x8x128xf32> to vector<8x128xf32>
    %c0_2 = arith.constant 0 : index
    %c0_3 = arith.constant 0 : index
    %2 = vector.load %arg2[%c0_2, %c0_3] : memref<128x128xf32, #tpu.memory_space<vmem>>, vector<128x128xf32>
    %cst = arith.constant dense<0.000000e+00> : vector<8x128xf32>
    %3 = tpu.matmul %1, %2, %cst {dimension_numbers = #tpu.dot_dimension_numbers<[1], [0], [0], [1], [0, 0, 1, 1], [], []>} : vector<8x128xf32>, vector<128x128xf32>, vector<8x128xf32> -> vector<8x128xf32>
    %4 = vector.shape_cast %3 : vector<8x128xf32> to vector<1x8x128xf32>
    "tpu.trace_start"() <{level = 10 : i32, message = "bqd,bkd->bqk"}> : () -> ()
    %cst_4 = arith.constant dense<0.000000e+00> : vector<1x8x8xf32>
    %5 = tpu.matmul %4, %0, %cst_4 {dimension_numbers = #tpu.dot_dimension_numbers<[2], [2], [1], [1], [0, 0, 0, 1, 1, 1], [0], [0]>} : vector<1x8x128xf32>, vector<1x8x128xf32>, vector<1x8x8xf32> -> vector<1x8x8xf32>
    "tpu.trace_stop"() : () -> ()
    %6 = tpu.iota {dimensions = array<i32: 0>} : vector<8x8xi32>
    %7 = tpu.iota {dimensions = array<i32: 1>} : vector<8x8xi32>
    %8 = arith.cmpi eq, %6, %7 : vector<8x8xi32>
    %cst_5 = arith.constant -1.000000e+30 : f32
    %cst_6 = arith.constant 0.000000e+00 : f32
    %9 = vector.broadcast %cst_5 : f32 to vector<8x8xf32>
    %10 = vector.broadcast %cst_6 : f32 to vector<8x8xf32>
    %11 = arith.select %8, %9, %10 : vector<8x8xi1>, vector<8x8xf32>
    %12 = vector.shape_cast %11 : vector<8x8xf32> to vector<1x8x8xf32>
    %13 = arith.addf %5, %12 : vector<1x8x8xf32>
    %cst_7 = arith.constant dense<0xFF800000> : vector<1x8xf32>
    %14 = vector.multi_reduction <maximumf>, %13, %cst_7 [2] : vector<1x8x8xf32> to vector<1x8xf32>
    %15 = vector.shape_cast %14 : vector<1x8xf32> to vector<1x8x1xf32>
    %16 = vector.broadcast %15 : vector<1x8x1xf32> to vector<1x8x8xf32>
    %17 = arith.subf %13, %16 : vector<1x8x8xf32>
    %18 = math.exp %17 : vector<1x8x8xf32>
    %cst_8 = arith.constant dense<0.000000e+00> : vector<1x8xf32>
    %19 = vector.multi_reduction <add>, %18, %cst_8 [2] : vector<1x8x8xf32> to vector<1x8xf32>
    %20 = vector.shape_cast %19 : vector<1x8xf32> to vector<1x8x1xf32>
    "tpu.trace_start"() <{level = 10 : i32, message = "bqk,bkd->bqd"}> : () -> ()
    %cst_9 = arith.constant dense<0.000000e+00> : vector<1x8x128xf32>
    %21 = tpu.matmul %18, %0, %cst_9 {dimension_numbers = #tpu.dot_dimension_numbers<[2], [1], [1], [2], [0, 0, 0, 1, 1, 2], [0], [0]>} : vector<1x8x8xf32>, vector<1x8x128xf32>, vector<1x8x128xf32> -> vector<1x8x128xf32>
    "tpu.trace_stop"() : () -> ()
    %cst_10 = arith.constant 1.000000e+00 : f32
    %22 = vector.broadcast %cst_10 : f32 to vector<1x8x1xf32>
    %23 = arith.divf %22, %20 : vector<1x8x1xf32>
    %24 = vector.broadcast %23 : vector<1x8x1xf32> to vector<1x8x128xf32>
    %25 = arith.mulf %21, %24 : vector<1x8x128xf32>
    %26 = vector.shape_cast %25 : vector<1x8x128xf32> to vector<8x128xf32>
    %c0_11 = arith.constant 0 : index
    %c0_12 = arith.constant 0 : index
    %27 = vector.load %arg3[%c0_11, %c0_12] : memref<128x128xf32, #tpu.memory_space<vmem>>, vector<128x128xf32>
    %cst_13 = arith.constant dense<0.000000e+00> : vector<8x128xf32>
    %28 = tpu.matmul %26, %27, %cst_13 {dimension_numbers = #tpu.dot_dimension_numbers<[1], [0], [0], [1], [0, 0, 1, 1], [], []>} : vector<8x128xf32>, vector<128x128xf32>, vector<8x128xf32> -> vector<8x128xf32>
    %c0_14 = arith.constant 0 : index
    %c0_15 = arith.constant 0 : index
    %29 = vector.load %arg4[%c0_14, %c0_15] : memref<1x128xf32, #tpu.memory_space<vmem>>, vector<1x128xf32>
    %30 = vector.broadcast %29 : vector<1x128xf32> to vector<8x128xf32>
    %31 = arith.addf %28, %30 : vector<8x128xf32>
    %cst_16 = arith.constant 0.000000e+00 : f32
    %32 = vector.broadcast %cst_16 : f32 to vector<8x128xf32>
    %33 = arith.maximumf %31, %32 : vector<8x128xf32>
    %34 = arith.addf %1, %33 : vector<8x128xf32>
    %35 = vector.shape_cast %34 : vector<8x128xf32> to vector<1x8x128xf32>
    %c0_17 = arith.constant 0 : index
    %c0_18 = arith.constant 0 : index
    %c0_19 = arith.constant 0 : index
    %36 = vector.load %arg5[%c0_17, %c0_18, %c0_19] : memref<1x8x128xf32, #tpu.memory_space<vmem>>, vector<1x8x128xf32>
    tpu.vector_store %arg5[%c0_17, %c0_18, %c0_19], %35 {strides = array<i32>} : memref<1x8x128xf32, #tpu.memory_space<vmem>>, vector<1x8x128xf32>,
    return
  }
  func.func @transform_0(%arg0: i32) -> (i32, i32, i32) {
    %c0_i32 = arith.constant 0 : i32
    %c0_i32_0 = arith.constant 0 : i32
    %c0_i32_1 = arith.constant 0 : i32
    return %arg0, %c0_i32, %c0_i32_0 : i32, i32, i32
  }
  func.func @transform_1(%arg0: i32) -> (i32, i32) {
    %c0_i32 = arith.constant 0 : i32
    %c0_i32_0 = arith.constant 0 : i32
    %c0_i32_1 = arith.constant 0 : i32
    return %c0_i32, %c0_i32_0 : i32, i32
  }
  func.func @transform_2(%arg0: i32) -> (i32, i32) {
    %c0_i32 = arith.constant 0 : i32
    %c0_i32_0 = arith.constant 0 : i32
    %c0_i32_1 = arith.constant 0 : i32
    return %c0_i32, %c0_i32_0 : i32, i32
  }
  func.func @transform_3(%arg0: i32) -> (i32, i32) {
    %c0_i32 = arith.constant 0 : i32
    %c0_i32_0 = arith.constant 0 : i32
    %c0_i32_1 = arith.constant 0 : i32
    return %c0_i32, %c0_i32_0 : i32, i32
  }
  func.func @transform_4(%arg0: i32) -> (i32, i32, i32) {
    %c0_i32 = arith.constant 0 : i32
    %c0_i32_0 = arith.constant 0 : i32
    %c0_i32_1 = arith.constant 0 : i32
    return %arg0, %c0_i32, %c0_i32_0 : i32, i32, i32
  }
}

</mosaic_0001>

<llo_original>
// kernel: tpu_custom_call.1
$region0: #{tpu_custom_call.1}
  #allocation0 [shape = 'u32[]', space=smem, size = 0x4, offset = 0x4, fixed_abs, tag = 'smem constant byte address 0x4 - core index']
  #allocation1 [shape = 'u32[144,128]{1,0:T(1,128)}', space=vmem, size = 0x12000, scoped, tag = 'internal scratch']
  %s0 = inlined_call_operand.hbm [shape: f32[2,8,128], index: 0, kind: input, shape index: {}]
  %s1 = inlined_call_operand.hbm [shape: f32[128,128], index: 1, kind: input, shape index: {}]
  %s2 = inlined_call_operand.hbm [shape: f32[128,128], index: 2, kind: input, shape index: {}]
  %s3 = inlined_call_operand.vmem [shape: f32[1,128], index: 3, kind: input, shape index: {}]
  %s4 = inlined_call_operand.hbm [shape: f32[2,8,128], index: 4, kind: output, shape index: {}]
  %s5 = sld [smem:[#allocation0]]
  $region61: #{tpu_custom_call.1} parent=0
    _
  %s7 = ssub.s32 1, %s5
  %s8 = scalar_select 0, %s7, %s5
  $region1: #{tpu_custom_call.1} parent=0
    #allocation2 [shape = 'u8[8192]{0}', space=vmem, size = 0x2000, scoped, tag = 'input window, operand 0']
    #allocation3 [shape = 's32[2]{0}', space=sflag, size = 0x8, scoped, tag = 'scoped memory for tpu_custom_call.1']
    #allocation4 [shape = 's32[2]{0}', space=sflag, size = 0x8, scoped, tag = 'scoped memory for tpu_custom_call.1']
    #allocation5 [shape = 'u8[65536]{0}', space=vmem, size = 0x10000, scoped, tag = 'input window, operand 1, single buffered']
    #allocation6 [shape = 's32[1]{0}', space=sflag, size = 0x4, scoped, tag = 'scoped memory for tpu_custom_call.1']
    #allocation7 [shape = 'u8[65536]{0}', space=vmem, size = 0x10000, scoped, tag = 'input window, operand 2, single buffered']
    #allocation8 [shape = 'u8[8192]{0}', space=vmem, size = 0x2000, scoped, tag = 'output window, operand 0']
    %9 = vsyncpa [#allocation3], 0
    %s10 = scalar_lea.sflag [#allocation3], 1
    %11 = vsyncpa %s10, 0
    %12 = vsyncpa [#allocation6], 0
    %13 = vsyncpa [#allocation4], 0
    %s14 = scalar_lea.sflag [#allocation4], 1
    %15 = vsyncpa %s14, 0
    loop: start=0, step=1, limit=4
    $region2: #{tpu_custom_call.1} parent=1 // loop_pre_header
      _
    $region3: #{tpu_custom_call.1} parent=1 // loop_header
      %s17 = sphi 0, %s21
      %p18 = scmp.ge.s32.totalorder %s17, 4
      %s27 = sphi 0, %s29
      %s30 = sphi 0, %s27
      %s31 = sphi 0, %s30
      %s47 = sphi 0, %s31
      %s51 = sphi 0, %s51
      %s53 = sphi 0, %s51
      %s54 = sphi 0, %s53
      %s68 = sphi 0, %s54
      %s72 = sphi 0, %s72
      %s74 = sphi 0, %s72
      %s75 = sphi 0, %s74
      %s89 = sphi 0, %s75
      %s93 = sphi 0, %s93
      %s95 = sphi 0, %s93
      %s96 = sphi 0, %s95
      %s110 = sphi 0, %s96
      %s116 = sphi 0, %s118
      %s119 = sphi 0, %s116
      %s120 = sphi 0, %s119
      %s136 = sphi 0, %s120
    $region4: #{tpu_custom_call.1} parent=1 // loop_header_branch
      %20 = sbr.rel (%p18) target = $region8
    $region5: #{tpu_custom_call.1} parent=1 // loop_body
      %s22 = ssub.s32 %s17, 1
      %s23 = ssub.s32 %s17, 2
      %s24 = sadd.s32 %s17, 1
      %s25 = ssub.s32 %s17, %s24
      %p26 = scmp.eq.s32.totalorder %s25, 0
      %s28 = sadd.s32 %s27, 1
      %s29 = scalar_select %p26, %s27, %s28
      %p32 = pneg %p26
      %p33 = scmp.eq.s32.totalorder %s17, 1
      %p34 = por %p32, %p33
      %p35 = scmp.ne.s32.totalorder %s27, %s30
      %p36 = scmp.eq.s32.totalorder %s17, 0
      %p37 = por %p35, %p36
      %p38 = scmp.ne.s32.totalorder %s27, %s30
      %p39 = scmp.eq.s32.totalorder %s22, 1
      %p40 = por %p38, %p39
      %p41 = scmp.ne.s32.totalorder %s30, %s31
      %p42 = scmp.eq.s32.totalorder %s22, 0
      %p43 = por %p41, %p42
      %p44 = scmp.ne.s32.totalorder %s30, %s31
      %p45 = scmp.eq.s32.totalorder %s23, 1
      %p46 = por %p44, %p45
      %p48 = scmp.ne.s32.totalorder %s31, %s47
      %p49 = scmp.eq.s32.totalorder %s23, 0
      %p50 = por %p48, %p49
      %s52 = sadd.s32 %s51, 1
      %p55 = scmp.eq.s32.totalorder %s17, 1
      %p56 = scmp.ne.s32.totalorder %s51, %s53
      %p57 = scmp.eq.s32.totalorder %s17, 0
      %p58 = por %p56, %p57
      %p59 = scmp.ne.s32.totalorder %s51, %s53
      %p60 = scmp.eq.s32.totalorder %s22, 1
      %p61 = por %p59, %p60
      %p62 = scmp.ne.s32.totalorder %s53, %s54
      %p63 = scmp.eq.s32.totalorder %s22, 0
      %p64 = por %p62, %p63
      %p65 = scmp.ne.s32.totalorder %s53, %s54
      %p66 = scmp.eq.s32.totalorder %s23, 1
      %p67 = por %p65, %p66
      %p69 = scmp.ne.s32.totalorder %s54, %s68
      %p70 = scmp.eq.s32.totalorder %s23, 0
      %p71 = por %p69, %p70
      %s73 = sadd.s32 %s72, 1
      %p76 = scmp.eq.s32.totalorder %s17, 1
      %p77 = scmp.ne.s32.totalorder %s72, %s74
      %p78 = scmp.eq.s32.totalorder %s17, 0
      %p79 = por %p77, %p78
      %p80 = scmp.ne.s32.totalorder %s72, %s74
      %p81 = scmp.eq.s32.totalorder %s22, 1
      %p82 = por %p80, %p81
      %p83 = scmp.ne.s32.totalorder %s74, %s75
      %p84 = scmp.eq.s32.totalorder %s22, 0
      %p85 = por %p83, %p84
      %p86 = scmp.ne.s32.totalorder %s74, %s75
      %p87 = scmp.eq.s32.totalorder %s23, 1
      %p88 = por %p86, %p87
      %p90 = scmp.ne.s32.totalorder %s75, %s89
      %p91 = scmp.eq.s32.totalorder %s23, 0
      %p92 = por %p90, %p91
      %s94 = sadd.s32 %s93, 1
      %p97 = scmp.eq.s32.totalorder %s17, 1
      %p98 = scmp.ne.s32.totalorder %s93, %s95
      %p99 = scmp.eq.s32.totalorder %s17, 0
      %p100 = por %p98, %p99
      %p101 = scmp.ne.s32.totalorder %s93, %s95
      %p102 = scmp.eq.s32.totalorder %s22, 1
      %p103 = por %p101, %p102
      %p104 = scmp.ne.s32.totalorder %s95, %s96
      %p105 = scmp.eq.s32.totalorder %s22, 0
      %p106 = por %p104, %p105
      %p107 = scmp.ne.s32.totalorder %s95, %s96
      %p108 = scmp.eq.s32.totalorder %s23, 1
      %p109 = por %p107, %p108
      %p111 = scmp.ne.s32.totalorder %s96, %s110
      %p112 = scmp.eq.s32.totalorder %s23, 0
      %p113 = por %p111, %p112
      %s114 = ssub.s32 %s17, %s24
      %p115 = scmp.eq.s32.totalorder %s114, 0
      %s117 = sadd.s32 %s116, 1
      %s118 = scalar_select %p115, %s116, %s117
      %p121 = pneg %p115
      %p122 = scmp.eq.s32.totalorder %s17, 1
      %p123 = por %p121, %p122
      %p124 = scmp.ne.s32.totalorder %s116, %s119
      %p125 = scmp.eq.s32.totalorder %s17, 0
      %p126 = por %p124, %p125
      %p127 = scmp.ne.s32.totalorder %s116, %s119
      %p128 = scmp.eq.s32.totalorder %s22, 1
      %p129 = por %p127, %p128
      %p130 = scmp.ne.s32.totalorder %s119, %s120
      %p131 = scmp.eq.s32.totalorder %s22, 0
      %p132 = por %p130, %p131
      %p133 = scmp.ne.s32.totalorder %s119, %s120
      %p134 = scmp.eq.s32.totalorder %s23, 1
      %p135 = por %p133, %p134
      %p137 = scmp.ne.s32.totalorder %s120, %s136
      %p138 = scmp.eq.s32.totalorder %s23, 0
      %p139 = por %p137, %p138
      %p140 = scmp.le.s32.totalorder 1, %s17
      %p141 = scmp.lt.s32.totalorder %s17, 3
      %p142 = pnand %p140, %p141
      %p143 = pneg %p142
      // Predicated region
      $region9: #{tpu_custom_call.1} parent=5 // pred_check
        _
      $region10: #{tpu_custom_call.1} parent=5 // pred_check_branch
        %145 = sbr.rel (%p142) target = $region12
      $region11: #{tpu_custom_call.1} parent=5 // pred_region
        %s146 = ssub.s32 %s17, 1
        // Predicated region
        $region13: #{tpu_custom_call.1} parent=11 // pred_check
          %p147 = pneg %p64
        $region14: #{tpu_custom_call.1} parent=11 // pred_check_branch
          %149 = sbr.rel (%p147) target = $region16
        $region15: #{tpu_custom_call.1} parent=11 // pred_region
          %s151 = ssub.s32 2048, 2048
          %152 = vsyncadd [#allocation6], %s151
          %s153 = sshll.u32 [#allocation5], 4
          %s154 = int_to_ptr.vmem [resolvable:$true] %s153
          %159 = dma.hbm_to_vmem [thread:$0]  %s1, 2048, %s154, [#allocation6], 128, 128, 8
        $region16: #{tpu_custom_call.1} parent=11 // pred_fallthru
          _
        // Predicated region
        $region17: #{tpu_custom_call.1} parent=11 // pred_check
          %p160 = pneg %p85
        $region18: #{tpu_custom_call.1} parent=11 // pred_check_branch
          %162 = sbr.rel (%p160) target = $region20
        $region19: #{tpu_custom_call.1} parent=11 // pred_region
          %s164 = ssub.s32 2048, 2048
          %165 = vsyncadd [#allocation6], %s164
          %s166 = sshll.u32 [#allocation7], 4
          %s167 = int_to_ptr.vmem [resolvable:$true] %s166
          %172 = dma.hbm_to_vmem [thread:$0]  %s2, 2048, %s167, [#allocation6], 128, 128, 8
        $region20: #{tpu_custom_call.1} parent=11 // pred_fallthru
          _
        // Predicated region
        $region21: #{tpu_custom_call.1} parent=11 // pred_check
          %p173 = pneg %p106
        $region22: #{tpu_custom_call.1} parent=11 // pred_check_branch
          %175 = sbr.rel (%p173) target = $region24
        $region23: #{tpu_custom_call.1} parent=11 // pred_region
          _
        $region24: #{tpu_custom_call.1} parent=11 // pred_fallthru
          _
      $region12: #{tpu_custom_call.1} parent=5 // pred_fallthru
        _
      %p176 = scmp.lt.s32.totalorder %s17, 2
      // Predicated region
      $region25: #{tpu_custom_call.1} parent=5 // pred_check
        %p177 = pneg %p176
      $region26: #{tpu_custom_call.1} parent=5 // pred_check_branch
        %179 = sbr.rel (%p177) target = $region28
      $region27: #{tpu_custom_call.1} parent=5 // pred_region
        // Predicated region
        $region29: #{tpu_custom_call.1} parent=27 // pred_check
          %p180 = pneg %p37
        $region30: #{tpu_custom_call.1} parent=27 // pred_check_branch
          %182 = sbr.rel (%p180) target = $region32
        $region31: #{tpu_custom_call.1} parent=27 // pred_region
          %s183 = sand.u32 %s27, 1
          %s184 = scalar_lea.sflag [#allocation3], %s183
          %s185 = sand.u32 %s27, 1
          %s186 = smul.addr %s185, 8
          %s187 = scalar_lea.vmem [#allocation2], %s186
          %s189 = ssub.s32 128, 128
          %190 = vsyncadd %s184, %s189
          %s191 = smul.addr %s17, 128
          %s192 = scalar_lea.hbm %s0, %s191
          %s194 = sshll.u32 %s187, 4
          %s195 = int_to_ptr.vmem [resolvable:$true] %s194
          %197 = dma.hbm_to_vmem [thread:$0]  %s192, 128, %s195, %s184
        $region32: #{tpu_custom_call.1} parent=27 // pred_fallthru
          _
      $region28: #{tpu_custom_call.1} parent=5 // pred_fallthru
        _
      %p198 = scmp.le.s32.totalorder 1, %s17
      %p199 = scmp.lt.s32.totalorder %s17, 3
      %p200 = pnand %p198, %p199
      %p201 = pneg %p200
      // Predicated region
      $region33: #{tpu_custom_call.1} parent=5 // pred_check
        _
      $region34: #{tpu_custom_call.1} parent=5 // pred_check_branch
        %203 = sbr.rel (%p200) target = $region36
      $region35: #{tpu_custom_call.1} parent=5 // pred_region
        %s204 = ssub.s32 %s17, 1
        %s205 = sand.u32 %s30, 1
        %s206 = scalar_lea.sflag [#allocation3], %s205
        %s207 = sand.u32 %s30, 1
        %s208 = smul.addr %s207, 8
        %s209 = scalar_lea.vmem [#allocation2], %s208
        // Predicated region
        $region37: #{tpu_custom_call.1} parent=35 // pred_check
          %p210 = pneg %p43
        $region38: #{tpu_custom_call.1} parent=35 // pred_check_branch
          %212 = sbr.rel (%p210) target = $region40
        $region39: #{tpu_custom_call.1} parent=35 // pred_region
          %213 = dma.done %s206, 128
        $region40: #{tpu_custom_call.1} parent=35 // pred_fallthru
          _
        // Predicated region
        $region41: #{tpu_custom_call.1} parent=35 // pred_check
          %p214 = pneg %p64
        $region42: #{tpu_custom_call.1} parent=35 // pred_check_branch
          %216 = sbr.rel (%p214) target = $region44
        $region43: #{tpu_custom_call.1} parent=35 // pred_region
          %217 = dma.done [#allocation6], 2048
        $region44: #{tpu_custom_call.1} parent=35 // pred_fallthru
          _
        // Predicated region
        $region45: #{tpu_custom_call.1} parent=35 // pred_check
          %p218 = pneg %p85
        $region46: #{tpu_custom_call.1} parent=35 // pred_check_branch
          %220 = sbr.rel (%p218) target = $region48
        $region47: #{tpu_custom_call.1} parent=35 // pred_region
          %221 = dma.done [#allocation6], 2048
        $region48: #{tpu_custom_call.1} parent=35 // pred_fallthru
          _
        %s222 = sand.u32 %s30, 1
        %s223 = scalar_lea.sflag [#allocation3], %s222
        %s224 = sand.u32 %s30, 1
        %s225 = smul.addr %s224, 8
        %s226 = scalar_lea.vmem [#allocation2], %s225
        %p227 = pneg %p43
        %p228 = pneg %p40
        %p229 = pneg %p64
        %p230 = pneg %p61
        %p231 = pneg %p85
        %p232 = pneg %p82
        %p233 = pneg %p106
        %p234 = pneg %p103
        %p235 = pneg %p132
        %p236 = pneg %p129
        %s237 = sand.u32 %s119, 1
        %s238 = scalar_lea.sflag [#allocation4], %s237
        %s239 = sand.u32 %s119, 1
        %s240 = smul.addr %s239, 8
        %s241 = scalar_lea.vmem [#allocation8], %s240
        %v242 = vld [vmem:[%s209] sm:$0xff]
        %v243 = vld [vmem:[#allocation5] sm:$0xff]
        %v244 = vld [vmem:[#allocation5 + $0x8] sm:$0xff]
        %v245 = vld [vmem:[#allocation5 + $0x10] sm:$0xff]
        %v246 = vld [vmem:[#allocation5 + $0x18] sm:$0xff]
        %v247 = vld [vmem:[#allocation5 + $0x20] sm:$0xff]
        %v248 = vld [vmem:[#allocation5 + $0x28] sm:$0xff]
        %v249 = vld [vmem:[#allocation5 + $0x30] sm:$0xff]
        %v250 = vld [vmem:[#allocation5 + $0x38] sm:$0xff]
        %v251 = vld [vmem:[#allocation5 + $0x40] sm:$0xff]
        %v252 = vld [vmem:[#allocation5 + $0x48] sm:$0xff]
        %v253 = vld [vmem:[#allocation5 + $0x50] sm:$0xff]
        %v254 = vld [vmem:[#allocation5 + $0x58] sm:$0xff]
        %v255 = vld [vmem:[#allocation5 + $0x60] sm:$0xff]
        %v256 = vld [vmem:[#allocation5 + $0x68] sm:$0xff]
        %v257 = vld [vmem:[#allocation5 + $0x70] sm:$0xff]
        %v258 = vld [vmem:[#allocation5 + $0x78] sm:$0xff]
        %259 = vmatprep.subr.mxu0 0.0
        %260 = vmatpush1.msra.mxu0 %v243
        %261 = vmatprep.subr.mxu0 0.0
        %262 = vmatpush1.msra.mxu0 %v244
        %263 = vmatprep.subr.mxu0 0.0
        %264 = vmatpush1.msra.mxu0 %v245
        %265 = vmatprep.subr.mxu0 0.0
        %266 = vmatpush1.msra.mxu0 %v246
        %267 = vmatprep.subr.mxu0 0.0
        %268 = vmatpush1.msra.mxu0 %v247
        %269 = vmatprep.subr.mxu0 0.0
        %270 = vmatpush1.msra.mxu0 %v248
        %271 = vmatprep.subr.mxu0 0.0
        %272 = vmatpush1.msra.mxu0 %v249
        %273 = vmatprep.subr.mxu0 0.0
        %274 = vmatpush1.msra.mxu0 %v250
        %275 = vmatprep.subr.mxu0 0.0
        %276 = vmatpush1.msra.mxu0 %v251
        %277 = vmatprep.subr.mxu0 0.0
        %278 = vmatpush1.msra.mxu0 %v252
        %279 = vmatprep.subr.mxu0 0.0
        %280 = vmatpush1.msra.mxu0 %v253
        %281 = vmatprep.subr.mxu0 0.0
        %282 = vmatpush1.msra.mxu0 %v254
        %283 = vmatprep.subr.mxu0 0.0
        %284 = vmatpush1.msra.mxu0 %v255
        %285 = vmatprep.subr.mxu0 0.0
        %286 = vmatpush1.msra.mxu0 %v256
        %287 = vmatprep.subr.mxu0 0.0
        %288 = vmatpush1.msra.mxu0 %v257
        %289 = vmatprep.subr.mxu0 0.0
        %290 = vmatpush1.msra.mxu0 %v258
        %291 = vmatprep.subr.mxu0 0.0
        %292 = vmatpush1.msra.mxu0 0.0
        %293 = vmatprep.subr.mxu0 0.0
        %294 = vmatpush1.msra.mxu0 0.0
        %295 = vmatprep.subr.mxu0 0.0
        %296 = vmatpush1.msra.mxu0 0.0
        %297 = vmatprep.subr.mxu0 0.0
        %298 = vmatpush1.msra.mxu0 0.0
        %299 = vmatprep.subr.mxu0 0.0
        %300 = vmatpush1.msra.mxu0 0.0
        %301 = vmatprep.subr.mxu0 0.0
        %302 = vmatpush1.msra.mxu0 0.0
        %303 = vmatprep.subr.mxu0 0.0
        %304 = vmatpush1.msra.mxu0 0.0
        %305 = vmatprep.subr.mxu0 0.0
        %306 = vmatpush1.msra.mxu0 0.0
        %307 = vmatprep.subr.mxu0 0.0
        %308 = vmatpush1.msra.mxu0 0.0
        %309 = vmatprep.subr.mxu0 0.0
        %310 = vmatpush1.msra.mxu0 0.0
        %311 = vmatprep.subr.mxu0 0.0
        %312 = vmatpush1.msra.mxu0 0.0
        %313 = vmatprep.subr.mxu0 0.0
        %314 = vmatpush1.msra.mxu0 0.0
        %315 = vmatprep.subr.mxu0 0.0
        %316 = vmatpush1.msra.mxu0 0.0
        %317 = vmatprep.subr.mxu0 0.0
        %318 = vmatpush1.msra.mxu0 0.0
        %319 = vmatprep.subr.mxu0 0.0
        %320 = vmatpush1.msra.mxu0 0.0
        %321 = vmatprep.subr.mxu0 0.0
        %322 = vmatpush1.msra.mxu0 0.0
        %323 = vmatprep.mubr.f32.mxu0 0.0
        %324 = vmatmul.mubr.f32.gmra.mrb[0].mxu0 %v242
        %v325 = vpop.f32.mrb[0].mxu0
        %v326 = vadd.f32 0.0, %v325
        %v327 = vpop.f32.mrb[0].mxu0
        %328 = vdwg.mxu0
        %v329 = vlaneseq
        %v330 = vshrl.u32 %v329, 7
        %v331 = vlaneseq
        %v332 = vand.u32 %v331, 127
        %vm333 = vcmp.eq.s32.totalorder %v330, %v332
        %v334 = vsel %vm333, -1e+30, 0.0
        %335 = vmatprep.subr.mxu0 0.0
        %336 = vmatpush1.xpose.msra.mxu0 %v242
        %337 = vmatprep.subr.mxu0 0.0
        %338 = vmatpush1.xpose.msra.mxu0 0.0
        %339 = vmatprep.subr.mxu0 0.0
        %340 = vmatpush1.xpose.msra.mxu0 0.0
        %341 = vmatprep.subr.mxu0 0.0
        %342 = vmatpush1.xpose.msra.mxu0 0.0
        %343 = vmatprep.subr.mxu0 0.0
        %344 = vmatpush1.xpose.msra.mxu0 0.0
        %345 = vmatprep.subr.mxu0 0.0
        %346 = vmatpush1.xpose.msra.mxu0 0.0
        %347 = vmatprep.subr.mxu0 0.0
        %348 = vmatpush1.xpose.msra.mxu0 0.0
        %349 = vmatprep.subr.mxu0 0.0
        %350 = vmatpush1.xpose.msra.mxu0 0.0
        %351 = vmatprep.subr.mxu0 0.0
        %352 = vmatpush1.xpose.msra.mxu0 0.0
        %353 = vmatprep.subr.mxu0 0.0
        %354 = vmatpush1.xpose.msra.mxu0 0.0
        %355 = vmatprep.subr.mxu0 0.0
        %356 = vmatpush1.xpose.msra.mxu0 0.0
        %357 = vmatprep.subr.mxu0 0.0
        %358 = vmatpush1.xpose.msra.mxu0 0.0
        %359 = vmatprep.subr.mxu0 0.0
        %360 = vmatpush1.xpose.msra.mxu0 0.0
        %361 = vmatprep.subr.mxu0 0.0
        %362 = vmatpush1.xpose.msra.mxu0 0.0
        %363 = vmatprep.subr.mxu0 0.0
        %364 = vmatpush1.xpose.msra.mxu0 0.0
        %365 = vmatprep.subr.mxu0 0.0
        %366 = vmatpush1.xpose.msra.mxu0 0.0
        %367 = vmatprep.subr.mxu0 0.0
        %368 = vmatpush1.xpose.msra.mxu0 0.0
        %369 = vmatprep.subr.mxu0 0.0
        %370 = vmatpush1.xpose.msra.mxu0 0.0
        %371 = vmatprep.subr.mxu0 0.0
        %372 = vmatpush1.xpose.msra.mxu0 0.0
        %373 = vmatprep.subr.mxu0 0.0
        %374 = vmatpush1.xpose.msra.mxu0 0.0
        %375 = vmatprep.subr.mxu0 0.0
        %376 = vmatpush1.xpose.msra.mxu0 0.0
        %377 = vmatprep.subr.mxu0 0.0
        %378 = vmatpush1.xpose.msra.mxu0 0.0
        %379 = vmatprep.subr.mxu0 0.0
        %380 = vmatpush1.xpose.msra.mxu0 0.0
        %381 = vmatprep.subr.mxu0 0.0
        %382 = vmatpush1.xpose.msra.mxu0 0.0
        %383 = vmatprep.subr.mxu0 0.0
        %384 = vmatpush1.xpose.msra.mxu0 0.0
        %385 = vmatprep.subr.mxu0 0.0
        %386 = vmatpush1.xpose.msra.mxu0 0.0
        %387 = vmatprep.subr.mxu0 0.0
        %388 = vmatpush1.xpose.msra.mxu0 0.0
        %389 = vmatprep.subr.mxu0 0.0
        %390 = vmatpush1.xpose.msra.mxu0 0.0
        %391 = vmatprep.subr.mxu0 0.0
        %392 = vmatpush1.xpose.msra.mxu0 0.0
        %393 = vmatprep.subr.mxu0 0.0
        %394 = vmatpush1.xpose.msra.mxu0 0.0
        %395 = vmatprep.subr.mxu0 0.0
        %396 = vmatpush1.xpose.msra.mxu0 0.0
        %397 = vmatprep.subr.mxu0 0.0
        %398 = vmatpush1.xpose.msra.mxu0 0.0
        %399 = vmatprep.mubr.f32.mxu0 0.0
        %400 = vmatmul.mubr.f32.gmra.mrb[0].mxu0 %v326
        %v401 = vpop.f32.mrb[0].mxu0
        %v402 = vadd.f32 %v334, %v401
        %v403 = vpop.f32.mrb[0].mxu0
        %404 = vdwg.mxu0
        %vm405 = vcmask 64512
        %v406 = vsel %vm405, %v402, -inf
        %407 = vmax.xlane.f32.xlu0 %v406
        %v408 = vpop.xlane.xlu0 %407
        %v409 = vsub.f32 %v402, %v408
        %v410 = vmul.f32 %v409, 1.442695
        %v411 = vpow.pop %v410
        %v412 = vsel %vm405, %v411, 0.0
        %413 = vadd.xlane.f32.xlu0 %v412
        %v414 = vpop.xlane.xlu0 %413
        %v416 = vsel %vm405, %v411, 0
        %418 = vmatprep.subr.mxu0 0.0
        %419 = vmatpush1.msra.mxu0 %v242
        %420 = vmatprep.subr.mxu0 0.0
        %421 = vmatpush1.msra.mxu0 0.0
        %422 = vmatprep.subr.mxu0 0.0
        %423 = vmatpush1.msra.mxu0 0.0
        %424 = vmatprep.subr.mxu0 0.0
        %425 = vmatpush1.msra.mxu0 0.0
        %426 = vmatprep.subr.mxu0 0.0
        %427 = vmatpush1.msra.mxu0 0.0
        %428 = vmatprep.subr.mxu0 0.0
        %429 = vmatpush1.msra.mxu0 0.0
        %430 = vmatprep.subr.mxu0 0.0
        %431 = vmatpush1.msra.mxu0 0.0
        %432 = vmatprep.subr.mxu0 0.0
        %433 = vmatpush1.msra.mxu0 0.0
        %434 = vmatprep.subr.mxu0 0.0
        %435 = vmatpush1.msra.mxu0 0.0
        %436 = vmatprep.subr.mxu0 0.0
        %437 = vmatpush1.msra.mxu0 0.0
        %438 = vmatprep.subr.mxu0 0.0
        %439 = vmatpush1.msra.mxu0 0.0
        %440 = vmatprep.subr.mxu0 0.0
        %441 = vmatpush1.msra.mxu0 0.0
        %442 = vmatprep.subr.mxu0 0.0
        %443 = vmatpush1.msra.mxu0 0.0
        %444 = vmatprep.subr.mxu0 0.0
        %445 = vmatpush1.msra.mxu0 0.0
        %446 = vmatprep.subr.mxu0 0.0
        %447 = vmatpush1.msra.mxu0 0.0
        %448 = vmatprep.subr.mxu0 0.0
        %449 = vmatpush1.msra.mxu0 0.0
        %450 = vmatprep.subr.mxu0 0.0
        %451 = vmatpush1.msra.mxu0 0.0
        %452 = vmatprep.subr.mxu0 0.0
        %453 = vmatpush1.msra.mxu0 0.0
        %454 = vmatprep.subr.mxu0 0.0
        %455 = vmatpush1.msra.mxu0 0.0
        %456 = vmatprep.subr.mxu0 0.0
        %457 = vmatpush1.msra.mxu0 0.0
        %458 = vmatprep.subr.mxu0 0.0
        %459 = vmatpush1.msra.mxu0 0.0
        %460 = vmatprep.subr.mxu0 0.0
        %461 = vmatpush1.msra.mxu0 0.0
        %462 = vmatprep.subr.mxu0 0.0
        %463 = vmatpush1.msra.mxu0 0.0
        %464 = vmatprep.subr.mxu0 0.0
        %465 = vmatpush1.msra.mxu0 0.0
        %466 = vmatprep.subr.mxu0 0.0
        %467 = vmatpush1.msra.mxu0 0.0
        %468 = vmatprep.subr.mxu0 0.0
        %469 = vmatpush1.msra.mxu0 0.0
        %470 = vmatprep.subr.mxu0 0.0
        %471 = vmatpush1.msra.mxu0 0.0
        %472 = vmatprep.subr.mxu0 0.0
        %473 = vmatpush1.msra.mxu0 0.0
        %474 = vmatprep.subr.mxu0 0.0
        %475 = vmatpush1.msra.mxu0 0.0
        %476 = vmatprep.subr.mxu0 0.0
        %477 = vmatpush1.msra.mxu0 0.0
        %478 = vmatprep.subr.mxu0 0.0
        %479 = vmatpush1.msra.mxu0 0.0
        %480 = vmatprep.subr.mxu0 0.0
        %481 = vmatpush1.msra.mxu0 0.0
        %482 = vmatprep.mubr.f32.mxu0 0.0
        %483 = vmatmul.mubr.f32.gmra.mrb[0].mxu0 %v416
        %v484 = vpop.f32.mrb[0].mxu0
        %v485 = vadd.f32 0.0, %v484
        %v486 = vpop.f32.mrb[0].mxu0
        %487 = vdwg.mxu0
        %v488 = vrcp.pop %v414
        %v489 = vmul.f32 1.0, %v488
        %v490 = vmul.f32 %v485, %v489
        %v491 = vld [vmem:[#allocation7] sm:$0xff]
        %v492 = vld [vmem:[#allocation7 + $0x8] sm:$0xff]
        %v493 = vld [vmem:[#allocation7 + $0x10] sm:$0xff]
        %v494 = vld [vmem:[#allocation7 + $0x18] sm:$0xff]
        %v495 = vld [vmem:[#allocation7 + $0x20] sm:$0xff]
        %v496 = vld [vmem:[#allocation7 + $0x28] sm:$0xff]
        %v497 = vld [vmem:[#allocation7 + $0x30] sm:$0xff]
        %v498 = vld [vmem:[#allocation7 + $0x38] sm:$0xff]
        %v499 = vld [vmem:[#allocation7 + $0x40] sm:$0xff]
        %v500 = vld [vmem:[#allocation7 + $0x48] sm:$0xff]
        %v501 = vld [vmem:[#allocation7 + $0x50] sm:$0xff]
        %v502 = vld [vmem:[#allocation7 + $0x58] sm:$0xff]
        %v503 = vld [vmem:[#allocation7 + $0x60] sm:$0xff]
        %v504 = vld [vmem:[#allocation7 + $0x68] sm:$0xff]
        %v505 = vld [vmem:[#allocation7 + $0x70] sm:$0xff]
        %v506 = vld [vmem:[#allocation7 + $0x78] sm:$0xff]
        %v507 = vld [vmem:[%s3] sm:$0x1]
        %v509 = vlaneseq
        %v510 = vshrl.u32 %v509, 7
        %v511 = vsub.s32 0, %v510
        %v512 = vrot.slane %v507, %v511
        %514 = vmatprep.subr.mxu0 0.0
        %515 = vmatpush1.msra.mxu0 %v491
        %516 = vmatprep.subr.mxu0 0.0
        %517 = vmatpush1.msra.mxu0 %v492
        %518 = vmatprep.subr.mxu0 0.0
        %519 = vmatpush1.msra.mxu0 %v493
        %520 = vmatprep.subr.mxu0 0.0
        %521 = vmatpush1.msra.mxu0 %v494
        %522 = vmatprep.subr.mxu0 0.0
        %523 = vmatpush1.msra.mxu0 %v495
        %524 = vmatprep.subr.mxu0 0.0
        %525 = vmatpush1.msra.mxu0 %v496
        %526 = vmatprep.subr.mxu0 0.0
        %527 = vmatpush1.msra.mxu0 %v497
        %528 = vmatprep.subr.mxu0 0.0
        %529 = vmatpush1.msra.mxu0 %v498
        %530 = vmatprep.subr.mxu0 0.0
        %531 = vmatpush1.msra.mxu0 %v499
        %532 = vmatprep.subr.mxu0 0.0
        %533 = vmatpush1.msra.mxu0 %v500
        %534 = vmatprep.subr.mxu0 0.0
        %535 = vmatpush1.msra.mxu0 %v501
        %536 = vmatprep.subr.mxu0 0.0
        %537 = vmatpush1.msra.mxu0 %v502
        %538 = vmatprep.subr.mxu0 0.0
        %539 = vmatpush1.msra.mxu0 %v503
        %540 = vmatprep.subr.mxu0 0.0
        %541 = vmatpush1.msra.mxu0 %v504
        %542 = vmatprep.subr.mxu0 0.0
        %543 = vmatpush1.msra.mxu0 %v505
        %544 = vmatprep.subr.mxu0 0.0
        %545 = vmatpush1.msra.mxu0 %v506
        %546 = vmatprep.subr.mxu0 0.0
        %547 = vmatpush1.msra.mxu0 0.0
        %548 = vmatprep.subr.mxu0 0.0
        %549 = vmatpush1.msra.mxu0 0.0
        %550 = vmatprep.subr.mxu0 0.0
        %551 = vmatpush1.msra.mxu0 0.0
        %552 = vmatprep.subr.mxu0 0.0
        %553 = vmatpush1.msra.mxu0 0.0
        %554 = vmatprep.subr.mxu0 0.0
        %555 = vmatpush1.msra.mxu0 0.0
        %556 = vmatprep.subr.mxu0 0.0
        %557 = vmatpush1.msra.mxu0 0.0
        %558 = vmatprep.subr.mxu0 0.0
        %559 = vmatpush1.msra.mxu0 0.0
        %560 = vmatprep.subr.mxu0 0.0
        %561 = vmatpush1.msra.mxu0 0.0
        %562 = vmatprep.subr.mxu0 0.0
        %563 = vmatpush1.msra.mxu0 0.0
        %564 = vmatprep.subr.mxu0 0.0
        %565 = vmatpush1.msra.mxu0 0.0
        %566 = vmatprep.subr.mxu0 0.0
        %567 = vmatpush1.msra.mxu0 0.0
        %568 = vmatprep.subr.mxu0 0.0
        %569 = vmatpush1.msra.mxu0 0.0
        %570 = vmatprep.subr.mxu0 0.0
        %571 = vmatpush1.msra.mxu0 0.0
        %572 = vmatprep.subr.mxu0 0.0
        %573 = vmatpush1.msra.mxu0 0.0
        %574 = vmatprep.subr.mxu0 0.0
        %575 = vmatpush1.msra.mxu0 0.0
        %576 = vmatprep.subr.mxu0 0.0
        %577 = vmatpush1.msra.mxu0 0.0
        %578 = vmatprep.mubr.f32.mxu0 0.0
        %579 = vmatmul.mubr.f32.gmra.mrb[0].mxu0 %v490
        %v580 = vpop.f32.mrb[0].mxu0
        %v581 = vadd.f32 %v512, %v580
        %v582 = vpop.f32.mrb[0].mxu0
        %583 = vdwg.mxu0
        %v584 = vmax.f32 %v581, 0.0
        %v585 = vadd.f32 %v242, %v584
        %586 = vst [vmem:[%s241] sm:$0xff] %v585
        %s587 = sand.u32 %s119, 1
        %s588 = scalar_lea.sflag [#allocation4], %s587
        %s589 = sand.u32 %s119, 1
        %s590 = smul.addr %s589, 8
        %s591 = scalar_lea.vmem [#allocation8], %s590
        // Predicated region
        $region49: #{tpu_custom_call.1} parent=35 // pred_check
          %p592 = pneg %p129
        $region50: #{tpu_custom_call.1} parent=35 // pred_check_branch
          %594 = sbr.rel (%p592) target = $region52
        $region51: #{tpu_custom_call.1} parent=35 // pred_region
          %s596 = ssub.s32 128, 128
          %597 = vsyncadd %s588, %s596
          %s598 = smul.addr %s22, 128
          %s599 = scalar_lea.hbm %s4, %s598
          %s601 = sshll.u32 %s591, 4
          %s602 = int_to_ptr.vmem [resolvable:$true] %s601
          %604 = dma.vmem_to_hbm [thread:$0]  %s602, 128, %s599, %s588
        $region52: #{tpu_custom_call.1} parent=35 // pred_fallthru
          _
      $region36: #{tpu_custom_call.1} parent=5 // pred_fallthru
        _
      %p605 = scmp.le.s32.totalorder 2, %s17
      // Predicated region
      $region53: #{tpu_custom_call.1} parent=5 // pred_check
        %p606 = pneg %p605
      $region54: #{tpu_custom_call.1} parent=5 // pred_check_branch
        %608 = sbr.rel (%p606) target = $region56
      $region55: #{tpu_custom_call.1} parent=5 // pred_region
        %s609 = ssub.s32 %s17, 2
        // Predicated region
        $region57: #{tpu_custom_call.1} parent=55 // pred_check
          %p610 = pneg %p135
        $region58: #{tpu_custom_call.1} parent=55 // pred_check_branch
          %612 = sbr.rel (%p610) target = $region60
        $region59: #{tpu_custom_call.1} parent=55 // pred_region
          %s613 = sand.u32 %s120, 1
          %s614 = scalar_lea.sflag [#allocation4], %s613
          %s615 = sand.u32 %s120, 1
          %s616 = smul.addr %s615, 8
          %s617 = scalar_lea.vmem [#allocation8], %s616
          %618 = dma.done %s614, 128
        $region60: #{tpu_custom_call.1} parent=55 // pred_fallthru
          _
      $region56: #{tpu_custom_call.1} parent=5 // pred_fallthru
        _
    $region6: #{tpu_custom_call.1} parent=1 // loop_footer
      %s21 = sadd.s32 1, %s17
    $region7: #{tpu_custom_call.1} parent=1 // loop_footer_branch
      %16 = sbr.rel target = $region3
    $region8: #{tpu_custom_call.1} parent=1 // loop_exit
      _
    %619 = vsyncpa [#allocation3], 1
    %s620 = scalar_lea.sflag [#allocation3], 1
    %621 = vsyncpa %s620, 1
    %622 = vsyncpa [#allocation6], 1
    %623 = vsyncpa [#allocation4], 1
    %s624 = scalar_lea.sflag [#allocation4], 1
    %625 = vsyncpa %s624, 1

</llo_original>
